<compile_context>
chip_gen: v6e
topology: v6e:2x2x1
jax: 0.10.0
libtpu: 0.0.40
codegen_flags: <defaults>
</compile_context>

<pallas_src>
import math
from functools import partial

import jax
import jax.numpy as jnp
from jax.experimental import pallas as pl
from jax.experimental.pallas import tpu as pltpu

# ----------------------------------------------------------------------------
# Standard YOLOv3 architecture config (what `config.ARCHITECTURE` refers to).
# tuple: (out_channels, kernel_size, stride)
# list : ["B", num_repeats]  (residual block)
# "S"  : scale prediction branch,  "U": upsample + route concat
# ----------------------------------------------------------------------------
ARCHITECTURE = [
    (32, 3, 1),
    (64, 3, 2),
    ["B", 1],
    (128, 3, 2),
    ["B", 2],
    (256, 3, 2),
    ["B", 8],
    (512, 3, 2),
    ["B", 8],
    (1024, 3, 2),
    ["B", 4],
    (512, 1, 1),
    (1024, 3, 1),
    "S",
    (256, 1, 1),
    "U",
    (256, 1, 1),
    (512, 3, 1),
    "S",
    (128, 1, 1),
    "U",
    (128, 1, 1),
    (256, 3, 1),
    "S",
]

_W_RESIDENT_BYTES = 4 * 1024 * 1024   # keep whole weight resident below this


def _round_up(x, m):
    return (x + m - 1) // m * m


# ----------------------------------------------------------------------------
# Pallas kernel: fused  out = act( (X @ W) + bias )
# X:(M,K) bf16, W:(K,N) bf16 (BN scale pre-folded), bias:(1,N) f32.
# Grid = (M tiles, N tiles, K tiles); K accumulates into an f32 VMEM scratch.
# NOTE: pl.program_id is only ever used in `pl.when` conditions (never inside
#       the decorated bodies) so the kernel also lowers under interpret mode.
# ----------------------------------------------------------------------------
def _mm_bias_act_kernel(x_ref, w_ref, b_ref, o_ref, acc_ref, *, use_act):
    @pl.when(pl.program_id(2) == 0)
    def _():
        acc_ref[...] = jnp.zeros_like(acc_ref)

    acc_ref[...] += jnp.dot(x_ref[...], w_ref[...],
                            preferred_element_type=jnp.float32)

    @pl.when(pl.program_id(2) == pl.num_programs(2) - 1)
    def _():
        y = acc_ref[...] + b_ref[...]
        if use_act:
            y = jnp.maximum(y, 0.1 * y)          # LeakyReLU(0.1)
        o_ref[...] = y.astype(o_ref.dtype)


def matmul_bias_act(x, w, b, use_act, out_dtype):
    """y = act(x @ w + b).  x:(M,K), w:(K,N) bf16, b:(1,N) f32 -> (M,N)."""
    M, K = x.shape
    _, N = w.shape
    x = x.astype(w.dtype)

    # --- tile selection -----------------------------------------------------
    if M >= 4096:
        tm = 512
    elif M >= 256:
        tm = 256
    else:
        tm = _round_up(M, 8)
    Mp = _round_up(M, tm)

    if K * N * w.dtype.itemsize <= _W_RESIDENT_BYTES:
        tk, tn = K, N                             # whole weight resident in VMEM
    else:
        tk = next((t for t in (512, 256, 128) if K % t == 0), K)
        tn = next((t for t in (256, 128) if N % t == 0), N)

    xp = x if Mp == M else jnp.pad(x, ((0, Mp - M), (0, 0)))
    grid = (Mp // tm, N // tn, K // tk)

    out = pl.pallas_call(
        partial(_mm_bias_act_kernel, use_act=use_act),
        out_shape=jax.ShapeDtypeStruct((Mp, N), out_dtype),
        grid_spec=pltpu.PrefetchScalarGridSpec(
            num_scalar_prefetch=0,
            grid=grid,
            in_specs=[
                pl.BlockSpec((tm, tk), lambda i, j, k: (i, k)),
                pl.BlockSpec((tk, tn), lambda i, j, k: (k, j)),
                pl.BlockSpec((1, tn), lambda i, j, k: (0, j)),
            ],
            out_specs=pl.BlockSpec((tm, tn), lambda i, j, k: (i, j)),
            scratch_shapes=[pltpu.VMEM((tm, tn), jnp.float32)],
        ),
        compiler_params=pltpu.CompilerParams(
            dimension_semantics=("parallel", "parallel", "arbitrary")),
    )(xp, w, b)

    return out if Mp == M else out[:M]


# ----------------------------------------------------------------------------
# Plain-JAX glue (runs inside the single top-level jit, so it fuses).
# ----------------------------------------------------------------------------
def im2col(x, k, s, p):
    """x:(B,H,W,C) -> patches (B*Ho*Wo, k*k*C), Ho, Wo."""
    B, H, W, C = x.shape
    xp = jnp.pad(x, ((0, 0), (p, p), (p, p), (0, 0)))
    Ho = (H + 2 * p - k) // s + 1
    Wo = (W + 2 * p - k) // s + 1
    cols = []
    for di in range(k):
        for dj in range(k):
            cols.append(xp[:, di:di + (Ho - 1) * s + 1:s,
                           dj:dj + (Wo - 1) * s + 1:s, :])
    patches = jnp.stack(cols, axis=3)             # (B, Ho, Wo, k*k, C)
    return patches.reshape(B * Ho * Wo, k * k * C), Ho, Wo


def conv_block(x, sp, pr):
    """CNNBlock: conv (+ folded BN + LeakyReLU) via the fused Pallas matmul."""
    B, H, W, C = x.shape
    out_dtype = jnp.bfloat16 if sp["act"] else jnp.float32
    if sp["path"] == "pw":                        # 1x1 conv: no im2col at all
        y = matmul_bias_act(x.reshape(B * H * W, C), pr["w"], pr["b"],
                            sp["act"], out_dtype)
        return y.reshape(B, H, W, -1)
    # k x k conv (k=3 here): explicit im2col + fused matmul
    patches, Ho, Wo = im2col(x, sp["k"], sp["stride"], sp["pad"])
    kk = pr["w"].shape[0]
    if patches.shape[1] != kk:                    # K padded to x8 at init
        patches = jnp.pad(patches, ((0, 0), (0, kk - patches.shape[1])))
    y = matmul_bias_act(patches, pr["w"], pr["b"], sp["act"], out_dtype)
    return y.reshape(B, Ho, Wo, -1)


def upsample2x(x):
    """Nearest-neighbour 2x upsample via a single broadcast+reshape."""
    B, H, W, C = x.shape
    y = jnp.broadcast_to(x[:, :, None, :, None, :], (B, H, 2, W, 2, C))
    return y.reshape(B, 2 * H, 2 * W, C)


def scale_pred_forward(sp, pr, x):
    y = conv_block(conv_block(x, sp["cnn1"], pr["cnn1"]), sp["cnn2"], pr["cnn2"])
    B, H, W, _ = y.shape
    nc = sp["num_classes"]
    y = y.reshape(B, H, W, 3, nc + 5)
    # matches torch reshape(B,3,nc+5,H,W).permute(0,1,3,4,2)
    return jnp.transpose(y, (0, 3, 1, 2, 4))


# ----------------------------------------------------------------------------
# Parameter init (deterministic, synthetic).  All weight preprocessing
# (matmul layout, BN-scale folding, bf16 cast, K padding) happens here, once.
# ----------------------------------------------------------------------------
def init_cnn(key, cin, cout, k, stride, bn_act):
    pad = 1 if k == 3 else 0
    kw, kb = jax.random.split(key)
    fan_in = cin * k * k
    w = jax.random.normal(kw, (k, k, cin, cout), jnp.float32) / math.sqrt(fan_in)
    if bn_act:
        eps = 1e-5
        gamma = jnp.ones((cout,), jnp.float32)
        beta = jnp.zeros((cout,), jnp.float32)
        run_mean = jnp.zeros((cout,), jnp.float32)
        run_var = jnp.ones((cout,), jnp.float32)
        scale = gamma / jnp.sqrt(run_var + eps)
        bias = beta - run_mean * scale
    else:
        scale = jnp.ones((cout,), jnp.float32)
        bias = jax.random.normal(kb, (cout,), jnp.float32) * 0.01   # conv bias

    path = "pw" if k == 1 else "col"

    wmat = (w * scale).reshape(k * k * cin, cout)  # fold BN scale into columns
    if path == "col" and wmat.shape[0] % 8:        # pad K to x8 (first conv only)
        wmat = jnp.pad(wmat, ((0, 8 - wmat.shape[0] % 8), (0, 0)))
    wmat = wmat.astype(jnp.bfloat16)

    spec = dict(k=k, stride=stride, pad=pad, cin=cin, cout=cout,
                path=path, act=bn_act)
    params = dict(w=wmat, b=bias.reshape(1, cout))
    return spec, params


def build_yolov3(key, in_channels=3, num_classes=80, cfg=ARCHITECTURE):
    specs, params = [], []
    c = in_channels
    keys = iter(jax.random.split(key, 4096))
    nk = lambda: next(keys)
    for module in cfg:
        if isinstance(module, tuple):
            out_c, ksize, stride = module
            s, p = init_cnn(nk(), c, out_c, ksize, stride, True)
            specs.append(("conv", s)); params.append(p)
            c = out_c
        elif isinstance(module, list):
            reps = module[1]
            bs, bp = [], []
            for _ in range(reps):
                s1, p1 = init_cnn(nk(), c, c // 2, 1, 1, True)
                s2, p2 = init_cnn(nk(), c // 2, c, 3, 1, True)
                bs.append((s1, s2)); bp.append((p1, p2))
            specs.append(("residual", dict(blocks=bs, use_residual=True,
                                           num_repeats=reps)))
            params.append(bp)
        elif isinstance(module, str):
            if module == "S":
                s1, p1 = init_cnn(nk(), c, c // 2, 1, 1, True)
                s2, p2 = init_cnn(nk(), c // 2, c, 3, 1, True)
                specs.append(("residual", dict(blocks=[(s1, s2)],
                                               use_residual=False,
                                               num_repeats=1)))
                params.append([(p1, p2)])
                s3, p3 = init_cnn(nk(), c, c // 2, 1, 1, True)
                specs.append(("conv", s3)); params.append(p3)
                s4, p4 = init_cnn(nk(), c // 2, c, 3, 1, True)
                s5, p5 = init_cnn(nk(), c, (num_classes + 5) * 3, 1, 1, False)
                specs.append(("scale_pred", dict(cnn1=s4, cnn2=s5,
                                                 num_classes=num_classes)))
                params.append(dict(cnn1=p4, cnn2=p5))
                c = c // 2
            elif module == "U":
                specs.append(("upsample", None)); params.append(())
                c = c * 3
    return specs, params


def yolov3_forward(specs, params, x_nchw):
    x = jnp.transpose(x_nchw, (0, 2, 3, 1)).astype(jnp.bfloat16)   # NCHW->NHWC bf16
    outputs, routes = [], []
    for (ltype, sp), pr in zip(specs, params):
        if ltype == "scale_pred":
            outputs.append(scale_pred_forward(sp, pr, x))
            continue
        if ltype == "conv":
            x = conv_block(x, sp, pr)
        elif ltype == "residual":
            for (s1, s2), (p1, p2) in zip(sp["blocks"], pr):
                y = conv_block(conv_block(x, s1, p1), s2, p2)
                x = (x + y) if sp["use_residual"] else y
            if sp["num_repeats"] == 8:
                routes.append(x)
        elif ltype == "upsample":
            x = upsample2x(x)
            x = jnp.concatenate([x, routes[-1]], axis=-1)  # cat along channels
            routes.pop()
    return outputs


# ----------------------------------------------------------------------------
# Self-check of the conv building blocks against a plain-JAX reference.
# ----------------------------------------------------------------------------
def _ref_conv(x, w, b, stride, pad):
    y = jax.lax.conv_general_dilated(
        x.astype(jnp.float32), w.astype(jnp.float32),
        window_strides=(stride, stride),
        padding=[(pad, pad), (pad, pad)],
        dimension_numbers=("NHWC", "HWIO", "NHWC"),
        precision=jax.lax.Precision.HIGHEST)
    return y + b


def _self_check():
    k1, k2, k3 = jax.random.split(jax.random.PRNGKey(1), 3)
    x = jax.random.normal(k1, (2, 8, 8, 16), jnp.float32).astype(jnp.bfloat16)
    w = jax.random.normal(k2, (3, 3, 16, 24), jnp.float32).astype(jnp.bfloat16)
    b = jax.random.normal(k3, (24,), jnp.float32)
    wmat = w.reshape(9 * 16, 24)
    b2 = b.reshape(1, 24)

    # 3x3 stride-1 and stride-2 via im2col + Pallas matmul.
    for stride in (1, 2):
        patches, Ho, Wo = im2col(x, 3, stride, 1)
        got = matmul_bias_act(patches, wmat, b2, False,
                              jnp.float32).reshape(2, Ho, Wo, 24)
        want = _ref_conv(x, w, b, stride, 1)
        assert bool(jnp.allclose(got, want, rtol=5e-2, atol=5e-2)), \
            f"im2col mismatch (stride={stride})"

    # 1x1 conv via direct reshape + Pallas matmul.
    w1 = w[1:2, 1:2]                               # (1,1,16,24)
    got = matmul_bias_act(x.reshape(-1, 16), w1.reshape(16, 24), b2,
                          False, jnp.float32).reshape(2, 8, 8, 24)
    want = _ref_conv(x, w1, b, 1, 0)
    assert bool(jnp.allclose(got, want, rtol=5e-2, atol=5e-2)), "pw mismatch"


# ----------------------------------------------------------------------------
if __name__ == "__main__":
    _self_check()

    key = jax.random.PRNGKey(0)
    pkey, xkey = jax.random.split(key)

    num_classes = 80
    specs, params = build_yolov3(pkey, in_channels=3, num_classes=num_classes)

    fwd = jax.jit(lambda p, xin: yolov3_forward(specs, p, xin))

    # Small input: batch=2, 3 channels, 32x32 spatial (must be divisible by 32).
    x = jax.random.normal(xkey, (2, 3, 32, 32), jnp.float32)

    outs = jax.block_until_ready(fwd(params, x))

    expected = [(2, 3, 1, 1, num_classes + 5),
                (2, 3, 2, 2, num_classes + 5),
                (2, 3, 4, 4, num_classes + 5)]
    got = [tuple(o.shape) for o in outs]
    assert got == expected, f"unexpected output shapes: {got}"
    assert all(o.dtype == jnp.float32 for o in outs), "head outputs must be f32"
    assert all(bool(jnp.all(jnp.isfinite(o))) for o in outs), "non-finite output"

    print("KERNEL_OK")
</pallas_src>

<mosaic_0001>
module attributes {stable_mosaic.version = 11 : i64} {
  func.func @_mm_bias_act_kernel(%arg0: i32, %arg1: i32, %arg2: i32, %arg3: memref<128x144xbf16, #tpu.memory_space<vmem>>, %arg4: memref<144x24xbf16, #tpu.memory_space<vmem>>, %arg5: memref<1x24xf32, #tpu.memory_space<vmem>>, %arg6: memref<128x24xf32, #tpu.memory_space<vmem>>, %arg7: memref<128x24xf32, #tpu.memory_space<vmem>>) attributes {dimension_semantics = [#tpu.dimension_semantics<parallel>, #tpu.dimension_semantics<parallel>, #tpu.dimension_semantics<arbitrary>], iteration_bounds = array<i64: 1, 1, 1>, scalar_prefetch = 0 : i64, scratch_operands = 1 : i64, tpu.core_type = #tpu.core_type<tc>, window_params = [{transform_indices = @transform_0, window_bounds = array<i64: 128, 144>}, {transform_indices = @transform_1, window_bounds = array<i64: 144, 24>}, {transform_indices = @transform_2, window_bounds = array<i64: 1, 24>}, {transform_indices = @transform_3, window_bounds = array<i64: 128, 24>}]} {
    %c0_i32 = arith.constant 0 : i32
    %0 = arith.cmpi eq, %arg2, %c0_i32 : i32
    %1 = arith.extui %0 : i1 to i32
    %c0_i32_0 = arith.constant 0 : i32
    %2 = arith.cmpi ne, %1, %c0_i32_0 : i32
    scf.if %2 {
      %cst_10 = arith.constant 0.000000e+00 : f32
      %12 = vector.broadcast %cst_10 : f32 to vector<128x24xf32>
      %c0_11 = arith.constant 0 : index
      %c0_12 = arith.constant 0 : index
      %13 = vector.load %arg7[%c0_11, %c0_12] : memref<128x24xf32, #tpu.memory_space<vmem>>, vector<128x24xf32>
      tpu.vector_store %arg7[%c0_11, %c0_12], %12 {strides = array<i32>} : memref<128x24xf32, #tpu.memory_space<vmem>>, vector<128x24xf32>,
    } else {
    }
    %c0 = arith.constant 0 : index
    %c0_1 = arith.constant 0 : index
    %3 = vector.load %arg7[%c0, %c0_1] : memref<128x24xf32, #tpu.memory_space<vmem>>, vector<128x24xf32>
    %c0_2 = arith.constant 0 : index
    %c0_3 = arith.constant 0 : index
    %4 = vector.load %arg3[%c0_2, %c0_3] : memref<128x144xbf16, #tpu.memory_space<vmem>>, vector<128x144xbf16>
    %c0_4 = arith.constant 0 : index
    %c0_5 = arith.constant 0 : index
    %5 = vector.load %arg4[%c0_4, %c0_5] : memref<144x24xbf16, #tpu.memory_space<vmem>>, vector<144x24xbf16>
    %cst = arith.constant dense<0.000000e+00> : vector<128x24xf32>
    %6 = tpu.matmul %4, %5, %cst {dimension_numbers = #tpu.dot_dimension_numbers<[1], [0], [0], [1], [0, 0, 1, 1], [], []>} : vector<128x144xbf16>, vector<144x24xbf16>, vector<128x24xf32> -> vector<128x24xf32>
    %7 = arith.addf %3, %6 : vector<128x24xf32>
    %c0_6 = arith.constant 0 : index
    %c0_7 = arith.constant 0 : index
    %8 = vector.load %arg7[%c0_6, %c0_7] : memref<128x24xf32, #tpu.memory_space<vmem>>, vector<128x24xf32>
    tpu.vector_store %arg7[%c0_6, %c0_7], %7 {strides = array<i32>} : memref<128x24xf32, #tpu.memory_space<vmem>>, vector<128x24xf32>,
    %c0_i32_8 = arith.constant 0 : i32
    %9 = arith.cmpi eq, %arg2, %c0_i32_8 : i32
    %10 = arith.extui %9 : i1 to i32
    %c0_i32_9 = arith.constant 0 : i32
    %11 = arith.cmpi ne, %10, %c0_i32_9 : i32
    scf.if %11 {
      %c0_10 = arith.constant 0 : index
      %c0_11 = arith.constant 0 : index
      %12 = vector.load %arg7[%c0_10, %c0_11] : memref<128x24xf32, #tpu.memory_space<vmem>>, vector<128x24xf32>
      %c0_12 = arith.constant 0 : index
      %c0_13 = arith.constant 0 : index
      %13 = vector.load %arg5[%c0_12, %c0_13] : memref<1x24xf32, #tpu.memory_space<vmem>>, vector<1x24xf32>
      %14 = vector.broadcast %13 : vector<1x24xf32> to vector<128x24xf32>
      %15 = arith.addf %12, %14 : vector<128x24xf32>
      %c0_14 = arith.constant 0 : index
      %c0_15 = arith.constant 0 : index
      %16 = vector.load %arg6[%c0_14, %c0_15] : memref<128x24xf32, #tpu.memory_space<vmem>>, vector<128x24xf32>
      tpu.vector_store %arg6[%c0_14, %c0_15], %15 {strides = array<i32>} : memref<128x24xf32, #tpu.memory_space<vmem>>, vector<128x24xf32>,
    } else {
    }
    return
  }
  func.func @transform_0(%arg0: i32, %arg1: i32, %arg2: i32) -> (i32, i32) {
    %c0_i32 = arith.constant 0 : i32
    return %arg0, %arg2 : i32, i32
  }
  func.func @transform_1(%arg0: i32, %arg1: i32, %arg2: i32) -> (i32, i32) {
    %c0_i32 = arith.constant 0 : i32
    return %arg2, %arg1 : i32, i32
  }
  func.func @transform_2(%arg0: i32, %arg1: i32, %arg2: i32) -> (i32, i32) {
    %c0_i32 = arith.constant 0 : i32
    %c0_i32_0 = arith.constant 0 : i32
    return %c0_i32, %arg1 : i32, i32
  }
  func.func @transform_3(%arg0: i32, %arg1: i32, %arg2: i32) -> (i32, i32) {
    %c0_i32 = arith.constant 0 : i32
    return %arg0, %arg1 : i32, i32
  }
}

</mosaic_0001>

<llo_original>
// kernel: tpu_custom_call.1
$region0: #{tpu_custom_call.1}
  #allocation0 [shape = 'u32[]', space=smem, size = 0x4, offset = 0x4, fixed_abs, tag = 'smem constant byte address 0x4 - core index']
  #allocation1 [shape = 'u32[144,128]{1,0:T(1,128)}', space=vmem, size = 0x12000, scoped, tag = 'internal scratch']
  #allocation2 [shape = 'f32[128,24]{1,0:T(8,128)}', space=vmem, size = 0x10000, scoped, tag = 'scratch operand']
  %s0 = inlined_call_operand.vmem [shape: bf16[128,144], index: 0, kind: input, shape index: {}]
  %s1 = inlined_call_operand.vmem [shape: bf16[144,24], index: 1, kind: input, shape index: {}]
  %s2 = inlined_call_operand.vmem [shape: f32[1,24], index: 2, kind: input, shape index: {}]
  %s3 = inlined_call_operand.vmem [shape: f32[128,24], index: 3, kind: output, shape index: {}]
  %s4 = sld [smem:[#allocation0]]
  $region30: #{tpu_custom_call.1} parent=0
    _
  %s6 = ssub.s32 1, %s4
  %s7 = scalar_select 0, %s6, %s4
  // Predicated region
  $region2: #{tpu_custom_call.1} parent=0 // pred_check
    _
  $region3: #{tpu_custom_call.1} parent=0 // pred_check_branch
    %9 = sbr.rel (0) target = $region5
  $region4: #{tpu_custom_call.1} parent=0 // pred_region
    _
  $region5: #{tpu_custom_call.1} parent=0 // pred_fallthru
    _
  // Predicated region
  $region6: #{tpu_custom_call.1} parent=0 // pred_check
    _
  $region7: #{tpu_custom_call.1} parent=0 // pred_check_branch
    %11 = sbr.rel (0) target = $region9
  $region8: #{tpu_custom_call.1} parent=0 // pred_region
    _
  $region9: #{tpu_custom_call.1} parent=0 // pred_fallthru
    _
  // Predicated region
  $region10: #{tpu_custom_call.1} parent=0 // pred_check
    _
  $region11: #{tpu_custom_call.1} parent=0 // pred_check_branch
    %13 = sbr.rel (0) target = $region13
  $region12: #{tpu_custom_call.1} parent=0 // pred_region
    _
  $region13: #{tpu_custom_call.1} parent=0 // pred_fallthru
    _
  %p15 = scmp.eq.s32.totalorder 0, 0
  // Predicated region
  $region14: #{tpu_custom_call.1} parent=0 // pred_check
    %p16 = pneg %p15
  $region15: #{tpu_custom_call.1} parent=0 // pred_check_branch
    %18 = sbr.rel (%p16) target = $region17
  $region16: #{tpu_custom_call.1} parent=0 // pred_region
    %vm19 = vcmask 195584
    %20 = vst.msk [vmem:[#allocation2] sm:$0xff] %vm19, 0.0
    %21 = vst.msk [vmem:[#allocation2 + $0x8] sm:$0xff] %vm19, 0.0
    %22 = vst.msk [vmem:[#allocation2 + $0x10] sm:$0xff] %vm19, 0.0
    %23 = vst.msk [vmem:[#allocation2 + $0x18] sm:$0xff] %vm19, 0.0
    %24 = vst.msk [vmem:[#allocation2 + $0x20] sm:$0xff] %vm19, 0.0
    %25 = vst.msk [vmem:[#allocation2 + $0x28] sm:$0xff] %vm19, 0.0
    %26 = vst.msk [vmem:[#allocation2 + $0x30] sm:$0xff] %vm19, 0.0
    %27 = vst.msk [vmem:[#allocation2 + $0x38] sm:$0xff] %vm19, 0.0
    %28 = vst.msk [vmem:[#allocation2 + $0x40] sm:$0xff] %vm19, 0.0
    %29 = vst.msk [vmem:[#allocation2 + $0x48] sm:$0xff] %vm19, 0.0
    %30 = vst.msk [vmem:[#allocation2 + $0x50] sm:$0xff] %vm19, 0.0
    %31 = vst.msk [vmem:[#allocation2 + $0x58] sm:$0xff] %vm19, 0.0
    %32 = vst.msk [vmem:[#allocation2 + $0x60] sm:$0xff] %vm19, 0.0
    %33 = vst.msk [vmem:[#allocation2 + $0x68] sm:$0xff] %vm19, 0.0
    %34 = vst.msk [vmem:[#allocation2 + $0x70] sm:$0xff] %vm19, 0.0
    %35 = vst.msk [vmem:[#allocation2 + $0x78] sm:$0xff] %vm19, 0.0
  $region17: #{tpu_custom_call.1} parent=0 // pred_fallthru
    _
  %v36 = vld [vmem:[#allocation2] sm:$0xff]
  %v37 = vld [vmem:[#allocation2 + $0x8] sm:$0xff]
  %v38 = vld [vmem:[#allocation2 + $0x10] sm:$0xff]
  %v39 = vld [vmem:[#allocation2 + $0x18] sm:$0xff]
  %v40 = vld [vmem:[#allocation2 + $0x20] sm:$0xff]
  %v41 = vld [vmem:[#allocation2 + $0x28] sm:$0xff]
  %v42 = vld [vmem:[#allocation2 + $0x30] sm:$0xff]
  %v43 = vld [vmem:[#allocation2 + $0x38] sm:$0xff]
  %v44 = vld [vmem:[#allocation2 + $0x40] sm:$0xff]
  %v45 = vld [vmem:[#allocation2 + $0x48] sm:$0xff]
  %v46 = vld [vmem:[#allocation2 + $0x50] sm:$0xff]
  %v47 = vld [vmem:[#allocation2 + $0x58] sm:$0xff]
  %v48 = vld [vmem:[#allocation2 + $0x60] sm:$0xff]
  %v49 = vld [vmem:[#allocation2 + $0x68] sm:$0xff]
  %v50 = vld [vmem:[#allocation2 + $0x70] sm:$0xff]
  %v51 = vld [vmem:[#allocation2 + $0x78] sm:$0xff]
  %v52 = vld [vmem:[%s0] sm:$0xff]
  %v53 = vld [vmem:[%s0 + $0x8] sm:$0xff]
  %v54 = vld [vmem:[%s0 + $0x10] sm:$0xff]
  %v55 = vld [vmem:[%s0 + $0x18] sm:$0xff]
  %v56 = vld [vmem:[%s0 + $0x20] sm:$0xff]
  %v57 = vld [vmem:[%s0 + $0x28] sm:$0xff]
  %v58 = vld [vmem:[%s0 + $0x30] sm:$0xff]
  %v59 = vld [vmem:[%s0 + $0x38] sm:$0xff]
  %v60 = vld [vmem:[%s0 + $0x40] sm:$0xff]
  %v61 = vld [vmem:[%s0 + $0x48] sm:$0xff]
  %v62 = vld [vmem:[%s0 + $0x50] sm:$0xff]
  %v63 = vld [vmem:[%s0 + $0x58] sm:$0xff]
  %v64 = vld [vmem:[%s0 + $0x60] sm:$0xff]
  %v65 = vld [vmem:[%s0 + $0x68] sm:$0xff]
  %v66 = vld [vmem:[%s0 + $0x70] sm:$0xff]
  %v67 = vld [vmem:[%s0 + $0x78] sm:$0xff]
  %v68 = vld [vmem:[%s1] sm:$0xf]
  %v69 = vld [vmem:[%s1 + $0x4] sm:$0xf]
  %v70 = vld [vmem:[%s1 + $0x8] sm:$0xf]
  %v71 = vld [vmem:[%s1 + $0xc] sm:$0xf]
  %v72 = vld [vmem:[%s1 + $0x10] sm:$0xf]
  %v73 = vld [vmem:[%s1 + $0x14] sm:$0xf]
  %v74 = vld [vmem:[%s1 + $0x18] sm:$0xf]
  %v75 = vld [vmem:[%s1 + $0x1c] sm:$0xf]
  %v76 = vld [vmem:[%s1 + $0x20] sm:$0xf]
  %v77 = vld [vmem:[%s1 + $0x24] sm:$0xf]
  %v78 = vld [vmem:[%s1 + $0x28] sm:$0xf]
  %v79 = vld [vmem:[%s1 + $0x2c] sm:$0xf]
  %v80 = vld [vmem:[%s1 + $0x30] sm:$0xf]
  %v81 = vld [vmem:[%s1 + $0x34] sm:$0xf]
  %v82 = vld [vmem:[%s1 + $0x38] sm:$0xf]
  %v83 = vld [vmem:[%s1 + $0x3c] sm:$0xf]
  %v84 = vld [vmem:[%s1 + $0x40] sm:$0xf]
  %v85 = vld [vmem:[%s1 + $0x44] sm:$0xf]
  %v102 = vunpack.c.l.b16 %v52
  %v103 = vunpack.c.h.b16 %v52
  %v104 = vunpack.c.l.b16 %v53
  %v105 = vunpack.c.h.b16 %v53
  %v106 = vunpack.c.l.b16 %v54
  %v107 = vunpack.c.h.b16 %v54
  %v108 = vunpack.c.l.b16 %v55
  %v109 = vunpack.c.h.b16 %v55
  %v110 = vunpack.c.l.b16 %v56
  %v111 = vunpack.c.h.b16 %v56
  %v112 = vunpack.c.l.b16 %v57
  %v113 = vunpack.c.h.b16 %v57
  %v114 = vunpack.c.l.b16 %v58
  %v115 = vunpack.c.h.b16 %v58
  %v116 = vunpack.c.l.b16 %v59
  %v117 = vunpack.c.h.b16 %v59
  %v118 = vunpack.c.l.b16 %v60
  %v119 = vunpack.c.h.b16 %v60
  %v120 = vunpack.c.l.b16 %v61
  %v121 = vunpack.c.h.b16 %v61
  %v122 = vunpack.c.l.b16 %v62
  %v123 = vunpack.c.h.b16 %v62
  %v124 = vunpack.c.l.b16 %v63
  %v125 = vunpack.c.h.b16 %v63
  %v126 = vunpack.c.l.b16 %v64
  %v127 = vunpack.c.h.b16 %v64
  %v128 = vunpack.c.l.b16 %v65
  %v129 = vunpack.c.h.b16 %v65
  %v130 = vunpack.c.l.b16 %v66
  %v131 = vunpack.c.h.b16 %v66
  %v132 = vunpack.c.l.b16 %v67
  %v133 = vunpack.c.h.b16 %v67
  %v134 = vpack.c.b16 %v104, %v102
  %v135 = vpack.c.b16 %v105, %v103
  %v136 = vpack.c.b16 %v108, %v106
  %v137 = vpack.c.b16 %v109, %v107
  %v138 = vpack.c.b16 %v112, %v110
  %v139 = vpack.c.b16 %v113, %v111
  %v140 = vpack.c.b16 %v116, %v114
  %v141 = vpack.c.b16 %v117, %v115
  %v142 = vpack.c.b16 %v120, %v118
  %v143 = vpack.c.b16 %v121, %v119
  %v144 = vpack.c.b16 %v124, %v122
  %v145 = vpack.c.b16 %v125, %v123
  %v146 = vpack.c.b16 %v128, %v126
  %v147 = vpack.c.b16 %v129, %v127
  %v148 = vpack.c.b16 %v132, %v130
  %v149 = vpack.c.b16 %v133, %v131
  %v176 = vunpack.c.l.b16 %v68
  %v177 = vunpack.c.l.b16 %v69
  %v178 = vunpack.c.l.b16 %v70
  %v179 = vunpack.c.l.b16 %v71
  %v180 = vunpack.c.l.b16 %v72
  %v181 = vunpack.c.l.b16 %v73
  %v182 = vunpack.c.l.b16 %v74
  %v183 = vunpack.c.l.b16 %v75
  %v184 = vunpack.c.l.b16 %v76
  %v185 = vunpack.c.l.b16 %v77
  %v186 = vunpack.c.l.b16 %v78
  %v187 = vunpack.c.l.b16 %v79
  %v188 = vunpack.c.l.b16 %v80
  %v189 = vunpack.c.l.b16 %v81
  %v190 = vunpack.c.l.b16 %v82
  %v191 = vunpack.c.l.b16 %v83
  %v192 = vunpack.c.l.b16 %v84
  %v193 = vunpack.c.l.b16 %v85
  %v194 = vpack.c.b16 %v177, %v176
  %v195 = vpack.c.b16 %v179, %v178
  %v196 = vpack.c.b16 %v181, %v180
  %v197 = vpack.c.b16 %v183, %v182
  %v198 = vpack.c.b16 %v185, %v184
  %v199 = vpack.c.b16 %v187, %v186
  %v200 = vpack.c.b16 %v189, %v188
  %v201 = vpack.c.b16 %v191, %v190
  %v202 = vpack.c.b16 %v193, %v192
  %vm212 = vcmask 130048
  %v214 = vsel %vm212, %v135, 0
  %v217 = vsel %vm212, %v137, 0
  %v220 = vsel %vm212, %v139, 0
  %v223 = vsel %vm212, %v141, 0
  %v226 = vsel %vm212, %v143, 0
  %v229 = vsel %vm212, %v145, 0
  %v232 = vsel %vm212, %v147, 0
  %v235 = vsel %vm212, %v149, 0
  %237 = vmatprep.subr.bf16.mxu0 0
  %238 = vmatpush1.bf16.msra.mxu0 %v201
  %239 = vmatprep.subr.bf16.mxu0 0
  %240 = vmatpush1.bf16.msra.mxu0 %v200
  %241 = vmatprep.subr.bf16.mxu0 0
  %242 = vmatpush1.bf16.msra.mxu0 %v199
  %243 = vmatprep.subr.bf16.mxu0 0
  %244 = vmatpush1.bf16.msra.mxu0 %v198
  %245 = vmatprep.subr.bf16.mxu0 0
  %246 = vmatpush1.bf16.msra.mxu0 %v197
  %247 = vmatprep.subr.bf16.mxu0 0
  %248 = vmatpush1.bf16.msra.mxu0 %v196
  %249 = vmatprep.subr.bf16.mxu0 0
  %250 = vmatpush1.bf16.msra.mxu0 %v195
  %251 = vmatprep.subr.bf16.mxu0 0
  %252 = vmatpush1.bf16.msra.mxu0 %v194
  %253 = vmatprep.subr.bf16.mxu0 0
  %254 = vmatpush2.bf16.msra.mxu0 0
  %255 = vmatprep.subr.bf16.mxu0 0
  %256 = vmatpush2.bf16.msra.mxu0 0
  %257 = vmatprep.subr.bf16.mxu0 0
  %258 = vmatpush2.bf16.msra.mxu0 0
  %259 = vmatprep.subr.bf16.mxu0 0
  %260 = vmatpush2.bf16.msra.mxu0 0
  %261 = vmatprep.subr.bf16.mxu0 0
  %262 = vmatpush2.bf16.msra.mxu0 0
  %263 = vmatprep.subr.bf16.mxu0 0
  %264 = vmatpush2.bf16.msra.mxu0 0
  %265 = vmatprep.subr.bf16.mxu0 0
  %266 = vmatpush2.bf16.msra.mxu0 0
  %267 = vmatprep.subr.bf16.mxu0 0
  %268 = vmatpush2.bf16.msra.mxu0 %v202
  %269 = vmatprep.mubr.bf16.mxu0 %v214
  %270 = vmatmul.mubr.bf16.gmra.mxu0 %v134
  %v271 = vpop.f32.mrf.mxu0
  %v272 = vadd.f32 0.0, %v271
  %v273 = vpop.f32.mrf.mxu0
  %v274 = vpop.f32.mrf.mxu0
  %v275 = vadd.f32 0.0, %v274
  %v276 = vpop.f32.mrf.mxu0
  %277 = vmatprep.mubr.bf16.mxu0 %v217
  %278 = vmatmul.mubr.bf16.gmra.mxu0 %v136
  %v279 = vpop.f32.mrf.mxu0
  %v280 = vadd.f32 0.0, %v279
  %v281 = vpop.f32.mrf.mxu0
  %v282 = vpop.f32.mrf.mxu0
  %v283 = vadd.f32 0.0, %v282
  %v284 = vpop.f32.mrf.mxu0
  %285 = vmatprep.mubr.bf16.mxu0 %v220
  %286 = vmatmul.mubr.bf16.gmra.mxu0 %v138
  %v287 = vpop.f32.mrf.mxu0
  %v288 = vadd.f32 0.0, %v287
  %v289 = vpop.f32.mrf.mxu0
  %v290 = vpop.f32.mrf.mxu0
  %v291 = vadd.f32 0.0, %v290
  %v292 = vpop.f32.mrf.mxu0
  %293 = vmatprep.mubr.bf16.mxu0 %v223
  %294 = vmatmul.mubr.bf16.gmra.mxu0 %v140
  %v295 = vpop.f32.mrf.mxu0
  %v296 = vadd.f32 0.0, %v295
  %v297 = vpop.f32.mrf.mxu0
  %v298 = vpop.f32.mrf.mxu0
  %v299 = vadd.f32 0.0, %v298
  %v300 = vpop.f32.mrf.mxu0
  %301 = vmatprep.mubr.bf16.mxu0 %v226
  %302 = vmatmul.mubr.bf16.gmra.mxu0 %v142
  %v303 = vpop.f32.mrf.mxu0
  %v304 = vadd.f32 0.0, %v303
  %v305 = vpop.f32.mrf.mxu0
  %v306 = vpop.f32.mrf.mxu0
  %v307 = vadd.f32 0.0, %v306
  %v308 = vpop.f32.mrf.mxu0
  %309 = vmatprep.mubr.bf16.mxu0 %v229
  %310 = vmatmul.mubr.bf16.gmra.mxu0 %v144
  %v311 = vpop.f32.mrf.mxu0
  %v312 = vadd.f32 0.0, %v311
  %v313 = vpop.f32.mrf.mxu0
  %v314 = vpop.f32.mrf.mxu0
  %v315 = vadd.f32 0.0, %v314
  %v316 = vpop.f32.mrf.mxu0
  %317 = vmatprep.mubr.bf16.mxu0 %v232
  %318 = vmatmul.mubr.bf16.gmra.mxu0 %v146
  %v319 = vpop.f32.mrf.mxu0
  %v320 = vadd.f32 0.0, %v319
  %v321 = vpop.f32.mrf.mxu0
  %v322 = vpop.f32.mrf.mxu0
  %v323 = vadd.f32 0.0, %v322
  %v324 = vpop.f32.mrf.mxu0
  %325 = vmatprep.mubr.bf16.mxu0 %v235
  %326 = vmatmul.mubr.bf16.gmra.mxu0 %v148
  %v327 = vpop.f32.mrf.mxu0
  %v328 = vadd.f32 0.0, %v327
  %v329 = vpop.f32.mrf.mxu0
  %v330 = vpop.f32.mrf.mxu0
  %v331 = vadd.f32 0.0, %v330
  %v332 = vpop.f32.mrf.mxu0
  %333 = vdwg.mxu0
  %v334 = vadd.f32 %v36, %v272
  %v335 = vadd.f32 %v37, %v275
  %v336 = vadd.f32 %v38, %v280
  %v337 = vadd.f32 %v39, %v283
  %v338 = vadd.f32 %v40, %v288
  %v339 = vadd.f32 %v41, %v291
  %v340 = vadd.f32 %v42, %v296
  %v341 = vadd.f32 %v43, %v299
  %v342 = vadd.f32 %v44, %v304
  %v343 = vadd.f32 %v45, %v307
  %v344 = vadd.f32 %v46, %v312
  %v345 = vadd.f32 %v47, %v315
  %v346 = vadd.f32 %v48, %v320
  %v347 = vadd.f32 %v49, %v323
  %v348 = vadd.f32 %v50, %v328
  %v349 = vadd.f32 %v51, %v331
  %vm350 = vcmask 195584
  %351 = vst.msk [vmem:[#allocation2] sm:$0xff] %vm350, %v334
  %352 = vst.msk [vmem:[#allocation2 + $0x8] sm:$0xff] %vm350, %v335
  %353 = vst.msk [vmem:[#allocation2 + $0x10] sm:$0xff] %vm350, %v336
  %354 = vst.msk [vmem:[#allocation2 + $0x18] sm:$0xff] %vm350, %v337
  %355 = vst.msk [vmem:[#allocation2 + $0x20] sm:$0xff] %vm350, %v338
  %356 = vst.msk [vmem:[#allocation2 + $0x28] sm:$0xff] %vm350, %v339
  %357 = vst.msk [vmem:[#allocation2 + $0x30] sm:$0xff] %vm350, %v340
  %358 = vst.msk [vmem:[#allocation2 + $0x38] sm:$0xff] %vm350, %v341
  %359 = vst.msk [vmem:[#allocation2 + $0x40] sm:$0xff] %vm350, %v342
  %360 = vst.msk [vmem:[#allocation2 + $0x48] sm:$0xff] %vm350, %v343
  %361 = vst.msk [vmem:[#allocation2 + $0x50] sm:$0xff] %vm350, %v344
  %362 = vst.msk [vmem:[#allocation2 + $0x58] sm:$0xff] %vm350, %v345
  %363 = vst.msk [vmem:[#allocation2 + $0x60] sm:$0xff] %vm350, %v346
  %364 = vst.msk [vmem:[#allocation2 + $0x68] sm:$0xff] %vm350, %v347
  %365 = vst.msk [vmem:[#allocation2 + $0x70] sm:$0xff] %vm350, %v348
  %366 = vst.msk [vmem:[#allocation2 + $0x78] sm:$0xff] %vm350, %v349
  // Predicated region
  $region18: #{tpu_custom_call.1} parent=0 // pred_check
    %p367 = pneg %p15
  $region19: #{tpu_custom_call.1} parent=0 // pred_check_branch
    %369 = sbr.rel (%p367) target = $region21
  $region20: #{tpu_custom_call.1} parent=0 // pred_region
    %v370 = vld [vmem:[#allocation2] sm:$0xff]
    %v371 = vld [vmem:[#allocation2 + $0x8] sm:$0xff]
    %v372 = vld [vmem:[#allocation2 + $0x10] sm:$0xff]
    %v373 = vld [vmem:[#allocation2 + $0x18] sm:$0xff]
    %v374 = vld [vmem:[#allocation2 + $0x20] sm:$0xff]
    %v375 = vld [vmem:[#allocation2 + $0x28] sm:$0xff]
    %v376 = vld [vmem:[#allocation2 + $0x30] sm:$0xff]
    %v377 = vld [vmem:[#allocation2 + $0x38] sm:$0xff]
    %v378 = vld [vmem:[#allocation2 + $0x40] sm:$0xff]
    %v379 = vld [vmem:[#allocation2 + $0x48] sm:$0xff]
    %v380 = vld [vmem:[#allocation2 + $0x50] sm:$0xff]
    %v381 = vld [vmem:[#allocation2 + $0x58] sm:$0xff]
    %v382 = vld [vmem:[#allocation2 + $0x60] sm:$0xff]
    %v383 = vld [vmem:[#allocation2 + $0x68] sm:$0xff]
    %v384 = vld [vmem:[#allocation2 + $0x70] sm:$0xff]
    %v385 = vld [vmem:[#allocation2 + $0x78] sm:$0xff]
    %v386 = vld [vmem:[%s2] sm:$0x1]
    %v388 = vlaneseq
    %v389 = vshrl.u32 %v388, 7
    %v390 = vsub.s32 0, %v389
    %v391 = vrot.slane %v386, %v390
    %v393 = vadd.f32 %v370, %v391
    %v394 = vadd.f32 %v371, %v391
    %v395 = vadd.f32 %v372, %v391
    %v396 = vadd.f32 %v373, %v391
    %v397 = vadd.f32 %v374, %v391
    %v398 = vadd.f32 %v375, %v391
    %v399 = vadd.f32 %v376, %v391
    %v400 = vadd.f32 %v377, %v391
    %v401 = vadd.f32 %v378, %v391
    %v402 = vadd.f32 %v379, %v391
    %v403 = vadd.f32 %v380, %v391
    %v404 = vadd.f32 %v381, %v391
    %v405 = vadd.f32 %v382, %v391
    %v406 = vadd.f32 %v383, %v391
    %v407 = vadd.f32 %v384, %v391
    %v408 = vadd.f32 %v385, %v391
    %409 = vst.msk [vmem:[%s3] sm:$0xff] %vm350, %v393
    %410 = vst.msk [vmem:[%s3 + $0x8] sm:$0xff] %vm350, %v394
    %411 = vst.msk [vmem:[%s3 + $0x10] sm:$0xff] %vm350, %v395
    %412 = vst.msk [vmem:[%s3 + $0x18] sm:$0xff] %vm350, %v396
    %413 = vst.msk [vmem:[%s3 + $0x20] sm:$0xff] %vm350, %v397
    %414 = vst.msk [vmem:[%s3 + $0x28] sm:$0xff] %vm350, %v398
    %415 = vst.msk [vmem:[%s3 + $0x30] sm:$0xff] %vm350, %v399
    %416 = vst.msk [vmem:[%s3 + $0x38] sm:$0xff] %vm350, %v400
    %417 = vst.msk [vmem:[%s3 + $0x40] sm:$0xff] %vm350, %v401
    %418 = vst.msk [vmem:[%s3 + $0x48] sm:$0xff] %vm350, %v402
    %419 = vst.msk [vmem:[%s3 + $0x50] sm:$0xff] %vm350, %v403
    %420 = vst.msk [vmem:[%s3 + $0x58] sm:$0xff] %vm350, %v404
    %421 = vst.msk [vmem:[%s3 + $0x60] sm:$0xff] %vm350, %v405
    %422 = vst.msk [vmem:[%s3 + $0x68] sm:$0xff] %vm350, %v406
    %423 = vst.msk [vmem:[%s3 + $0x70] sm:$0xff] %vm350, %v407
    %424 = vst.msk [vmem:[%s3 + $0x78] sm:$0xff] %vm350, %v408
  $region21: #{tpu_custom_call.1} parent=0 // pred_fallthru
    _
  // Predicated region
  $region22: #{tpu_custom_call.1} parent=0 // pred_check
    _
  $region23: #{tpu_custom_call.1} parent=0 // pred_check_branch
    %426 = sbr.rel (0) target = $region25
  $region24: #{tpu_custom_call.1} parent=0 // pred_region
    _
  $region25: #{tpu_custom_call.1} parent=0 // pred_fallthru
    _
  // Predicated region
  $region26: #{tpu_custom_call.1} parent=0 // pred_check
    _
  $region27: #{tpu_custom_call.1} parent=0 // pred_check_branch
    %428 = sbr.rel (0) target = $region29
  $region28: #{tpu_custom_call.1} parent=0 // pred_region
    _
  $region29: #{tpu_custom_call.1} parent=0 // pred_fallthru
    _

</llo_original>
